<compile_context>
chip_gen: v5e
topology: v5e:2x2
jax: 0.10.0
libtpu: 0.0.40
codegen_flags: <defaults>
</compile_context>

<pallas_src>
import functools

import jax
import jax.numpy as jnp
from jax.experimental import pallas as pl
from jax.experimental.pallas import tpu as pltpu


def _conv3x3_kernel(xc_ref, xt_ref, xb_ref, w_ref, b_ref, o_ref, *,
                    use_refl, n_h, W, fold_k):
    """One (batch n, row-tile t) grid step.

    xc_ref: (1, C, TH*W) f32  this tile's rows, spatial flattened on lanes
    xt_ref: (1, C, TH*W) f32  row-tile t-1 (clamped) -> top halo row
    xb_ref: (1, C, TH*W) f32  row-tile t+1 (clamped) -> bottom halo row
    w_ref:  (O, 9*C)     f32  weights, columns ordered (kh, kw, c)
    b_ref:  (O, 1)       f32
    o_ref:  (1, O, TH*W) f32  lane-dense output tile (no channel padding)
    """
    C = xc_ref.shape[1]
    M = xc_ref.shape[2]
    TH = M // W
    O = o_ref.shape[1]

    t = pl.program_id(1)
    first_tile = t == 0
    last_tile = t == n_h - 1

    xc = xc_ref[0]                                            # (C, M)

    # ---- single halo rows, static slices out of the t+-1 blocks -----------
    if use_refl:
        # nn.ReflectionPad2d(1): row -1 -> row 1, row H -> row H-2.
        top = jnp.where(first_tile,
                        xt_ref[0, :, W:2 * W],
                        xt_ref[0, :, (TH - 1) * W:TH * W])
        bot = jnp.where(last_tile,
                        xb_ref[0, :, (TH - 2) * W:(TH - 1) * W],
                        xb_ref[0, :, 0:W])
    else:
        # nn.ZeroPad2d(1): rows outside the image are zero (select, no mul).
        top = jnp.where(first_tile, 0.0, xt_ref[0, :, (TH - 1) * W:TH * W])
        bot = jnp.where(last_tile, 0.0, xb_ref[0, :, 0:W])

    # ---- kh (vertical) shifts: one lane-concat each ------------------------
    v_up = jnp.concatenate([top, xc[:, :M - W]], axis=1)      # row r -> x row r-1
    v_mid = xc                                                # row r -> x row r
    v_dn = jnp.concatenate([xc[:, W:], bot], axis=1)          # row r -> x row r+1

    # ---- kw (horizontal) shifts on the flattened lanes ---------------------
    # 1-lane shifts; values that leak across row boundaries land exactly in the
    # per-row border lanes, which are overwritten by the reflect/zero fixup.
    # (pltpu.roll along lanes is the XLU alternative; the 1-lane concats keep
    # the shift direction explicit.)
    lane = jax.lax.broadcasted_iota(jnp.int32, (1, M), 1)
    col = jnp.bitwise_and(lane, W - 1) if (W & (W - 1)) == 0 else lane % W
    is_first_col = col == 0
    is_last_col = col == W - 1

    def shift_right(v):   # out[:, c] = v[:, c-1]   (c=0 junk, fixed below)
        return jnp.concatenate([v[:, :1], v[:, :M - 1]], axis=1)

    def shift_left(v):    # out[:, c] = v[:, c+1]   (c=M-1 junk, fixed below)
        return jnp.concatenate([v[:, 1:], v[:, M - 1:]], axis=1)

    def kw_taps(v):
        rr = shift_right(v)
        rl = shift_left(v)
        if use_refl:
            left = jnp.where(is_first_col, rl, rr)    # col -1 -> col 1
            right = jnp.where(is_last_col, rr, rl)    # col W  -> col W-2
        else:
            left = jnp.where(is_first_col, 0.0, rr)
            right = jnp.where(is_last_col, 0.0, rl)
        return left, v, right                          # kw = 0, 1, 2

    taps = []
    for v in (v_up, v_mid, v_dn):                      # kh = 0, 1, 2
        taps.extend(kw_taps(v))                        # 9 x (C, M)

    bias = b_ref[...]                                  # (O, 1)

    if fold_k:
        # Small C: one deep matmul, K = 9*C; result lanes = TH*W (dense).
        patches = jnp.concatenate(taps, axis=0)        # (9*C, M) leading-dim concat
        acc = jnp.dot(w_ref[...], patches, preferred_element_type=jnp.float32)
    else:
        # Large C: three accumulating matmuls, K = 3*C each (K tile already full).
        acc = jnp.zeros((O, M), jnp.float32)
        for kh in range(3):
            rhs = jnp.concatenate(taps[3 * kh:3 * kh + 3], axis=0)   # (3*C, M)
            acc = acc + jnp.dot(w_ref[:, 3 * C * kh:3 * C * (kh + 1)], rhs,
                                preferred_element_type=jnp.float32)

    o_ref[0] = acc + bias


def _pick_tile_h(H, W, N):
    """Row-tile height TH: divides H, keeps TH*W lane-aligned (mult. of 128)
    unless it spans the whole image, targets <= 2048 pixels per MXU call, and
    keeps >= 2 grid steps so both v7x TensorCores get work."""
    cands = [d for d in range(2, H + 1) if H % d == 0 and (d * W) % 128 == 0]
    if H not in cands:
        cands.append(H)
    cands.sort()
    fitting = [d for d in cands if d * W <= 2048]
    th = fitting[-1] if fitting else cands[0]
    if N * (H // th) < 2:
        smaller = [d for d in cands if d < th and d * W >= 128]
        if smaller:
            th = smaller[-1]
    return th


@functools.partial(jax.jit, static_argnames=("use_refl",))
def conv3x3_pallas(x, weight, bias, use_refl=True):
    """x: (N, C, H, W) f32; weight: (O, C, 3, 3) f32; bias: (O,) f32 -> (N, O, H, W) f32."""
    N, C, H, W = x.shape
    O = weight.shape[0]
    if H < 2 or W < 2:
        # TODO(synk): degenerate spatial sizes (H or W < 2) are not supported.
        raise ValueError("conv3x3_pallas requires H >= 2 and W >= 2")

    TH = _pick_tile_h(H, W, N)
    n_h = H // TH
    M = TH * W
    K = 9 * C

    # Metadata-only reshape (contiguous minor dims merge): same HBM buffer.
    x_flat = x.reshape(N, C, H * W)

    # Weight/bias prep runs once on the tiny weight tensor.
    # (O, C, kh, kw) -> (O, kh, kw, C) -> (O, 9C), matching the kernel tap order.
    w_mat = jnp.transpose(weight, (0, 2, 3, 1)).reshape(O, K).astype(jnp.float32)
    b_mat = bias.reshape(O, 1).astype(jnp.float32)

    fold_k = K < 256   # fold all 9 taps only while K underfills the MXU K tile

    kernel = functools.partial(_conv3x3_kernel, use_refl=use_refl,
                               n_h=n_h, W=W, fold_k=fold_k)

    out_flat = pl.pallas_call(
        kernel,
        out_shape=jax.ShapeDtypeStruct((N, O, H * W), jnp.float32),
        grid_spec=pltpu.PrefetchScalarGridSpec(
            num_scalar_prefetch=0,
            grid=(N, n_h),
            in_specs=[
                # this row-tile (spatial flattened onto lanes)
                pl.BlockSpec((1, C, M), lambda n, t: (n, 0, t)),
                # clamped neighbour tiles supplying the 1-row halos; they ride
                # the normal auto-pipeline, so no exposed per-step halo DMA.
                pl.BlockSpec((1, C, M), lambda n, t: (n, 0, jnp.maximum(t - 1, 0))),
                pl.BlockSpec((1, C, M),
                             lambda n, t: (n, 0, jnp.minimum(t + 1, n_h - 1))),
                # weights / bias resident across the whole grid
                pl.BlockSpec((O, K), lambda n, t: (0, 0)),
                pl.BlockSpec((O, 1), lambda n, t: (0, 0)),
            ],
            out_specs=pl.BlockSpec((1, O, M), lambda n, t: (n, 0, t)),
        ),
        compiler_params=pltpu.CompilerParams(
            dimension_semantics=("parallel", "parallel"),
            # modest tiles; 48 MiB leaves headroom under v7x's 64 MiB physical
            # VMEM while still allowing generous tiles on v5e/v6e.
            vmem_limit_bytes=48 * 1024 * 1024,
        ),
    )(x_flat, x_flat, x_flat, w_mat, b_mat)

    # Metadata-only reshape back to the module's NCHW output layout.
    return out_flat.reshape(N, O, H, W)


if __name__ == "__main__":
    key = jax.random.PRNGKey(0)

    def reference(x, weight, bias, use_refl):
        mode = "reflect" if use_refl else "constant"
        x_pad = jnp.pad(x, ((0, 0), (0, 0), (1, 1), (1, 1)), mode=mode)
        out = jax.lax.conv_general_dilated(
            x_pad, weight, window_strides=(1, 1), padding="VALID",
            dimension_numbers=("NCHW", "OIHW", "NCHW"),
            precision=jax.lax.Precision.HIGHEST)
        return out + bias[None, :, None, None]

    # (N, C_in, C_out, H, W): small-C folded-K path, plus a larger-C config
    # that exercises the per-kh accumulating path and multi-row-tile halos.
    configs = [(2, 4, 8, 16, 16), (1, 32, 8, 16, 16)]

    for (N, C_in, C_out, H, W) in configs:
        k_x, k_w, k_b = jax.random.split(jax.random.fold_in(key, C_in), 3)
        x = jax.random.normal(k_x, (N, C_in, H, W), dtype=jnp.float32)
        weight = jax.random.normal(k_w, (C_out, C_in, 3, 3), dtype=jnp.float32) * 0.1
        bias = jax.random.normal(k_b, (C_out,), dtype=jnp.float32) * 0.1

        for use_refl in (True, False):
            out = jax.block_until_ready(
                conv3x3_pallas(x, weight, bias, use_refl=use_refl))
            ref = reference(x, weight, bias, use_refl)
            assert out.shape == (N, C_out, H, W)
            assert out.dtype == jnp.float32
            max_err = float(jnp.max(jnp.abs(out - ref)))
            assert jnp.allclose(out, ref, atol=2e-2, rtol=2e-2), (
                f"mismatch (use_refl={use_refl}, C={C_in}): max |err| = {max_err}")

    print("KERNEL_OK")
</pallas_src>

<mosaic_0001>
module attributes {stable_mosaic.version = 11 : i64} {
  func.func @_conv3x3_kernel(%arg0: i32, %arg1: i32, %arg2: memref<1x4x256xf32, #tpu.memory_space<vmem>>, %arg3: memref<1x4x256xf32, #tpu.memory_space<vmem>>, %arg4: memref<1x4x256xf32, #tpu.memory_space<vmem>>, %arg5: memref<8x36xf32, #tpu.memory_space<vmem>>, %arg6: memref<8x1xf32, #tpu.memory_space<vmem>>, %arg7: memref<1x8x256xf32, #tpu.memory_space<vmem>>) attributes {dimension_semantics = [#tpu.dimension_semantics<parallel>, #tpu.dimension_semantics<parallel>], iteration_bounds = array<i64: 2, 1>, scalar_prefetch = 0 : i64, scratch_operands = 0 : i64, tpu.core_type = #tpu.core_type<tc>, window_params = [{transform_indices = @transform_0, window_bounds = array<i64: 1, 4, 256>}, {transform_indices = @transform_1, window_bounds = array<i64: 1, 4, 256>}, {transform_indices = @transform_2, window_bounds = array<i64: 1, 4, 256>}, {pipeline_mode = #tpu.pipeline_mode<synchronous>, transform_indices = @transform_3, window_bounds = array<i64: 8, 36>}, {pipeline_mode = #tpu.pipeline_mode<synchronous>, transform_indices = @transform_4, window_bounds = array<i64: 8, 1>}, {transform_indices = @transform_5, window_bounds = array<i64: 1, 8, 256>}]} {
    %c0_i32 = arith.constant 0 : i32
    %0 = arith.cmpi eq, %arg1, %c0_i32 : i32
    %c0_i32_0 = arith.constant 0 : i32
    %1 = arith.cmpi eq, %arg1, %c0_i32_0 : i32
    %c0 = arith.constant 0 : index
    %c0_1 = arith.constant 0 : index
    %c0_2 = arith.constant 0 : index
    %2 = vector.load %arg2[%c0, %c0_1, %c0_2] : memref<1x4x256xf32, #tpu.memory_space<vmem>>, vector<1x4x256xf32>
    %3 = vector.shape_cast %2 : vector<1x4x256xf32> to vector<4x256xf32>
    %c0_3 = arith.constant 0 : index
    %c0_4 = arith.constant 0 : index
    %c16 = arith.constant 16 : index
    %4 = vector.load %arg3[%c0_3, %c0_4, %c16] : memref<1x4x256xf32, #tpu.memory_space<vmem>>, vector<1x4x16xf32>
    %5 = vector.shape_cast %4 : vector<1x4x16xf32> to vector<4x16xf32>
    %c0_5 = arith.constant 0 : index
    %c0_6 = arith.constant 0 : index
    %c240 = arith.constant 240 : index
    %6 = vector.load %arg3[%c0_5, %c0_6, %c240] : memref<1x4x256xf32, #tpu.memory_space<vmem>>, vector<1x4x16xf32>
    %7 = vector.shape_cast %6 : vector<1x4x16xf32> to vector<4x16xf32>
    %8 = arith.select %0, %5, %7 : vector<4x16xf32>
    %c0_7 = arith.constant 0 : index
    %c0_8 = arith.constant 0 : index
    %c224 = arith.constant 224 : index
    %9 = vector.load %arg4[%c0_7, %c0_8, %c224] : memref<1x4x256xf32, #tpu.memory_space<vmem>>, vector<1x4x16xf32>
    %10 = vector.shape_cast %9 : vector<1x4x16xf32> to vector<4x16xf32>
    %c0_9 = arith.constant 0 : index
    %c0_10 = arith.constant 0 : index
    %c0_11 = arith.constant 0 : index
    %11 = vector.load %arg4[%c0_9, %c0_10, %c0_11] : memref<1x4x256xf32, #tpu.memory_space<vmem>>, vector<1x4x16xf32>
    %12 = vector.shape_cast %11 : vector<1x4x16xf32> to vector<4x16xf32>
    %13 = arith.select %1, %10, %12 : vector<4x16xf32>
    %14 = vector.extract_strided_slice %3 {offsets = [0, 0], sizes = [4, 240], strides = [1, 1]} : vector<4x256xf32> to vector<4x240xf32>
    %15 = tpu.concatenate %8, %14 in 1 : vector<4x16xf32>, vector<4x240xf32> -> vector<4x256xf32>
    %16 = vector.extract_strided_slice %3 {offsets = [0, 16], sizes = [4, 240], strides = [1, 1]} : vector<4x256xf32> to vector<4x240xf32>
    %17 = tpu.concatenate %16, %13 in 1 : vector<4x240xf32>, vector<4x16xf32> -> vector<4x256xf32>
    %18 = tpu.iota {dimensions = array<i32: 1>} : vector<1x256xi32>
    %c15_i32 = arith.constant 15 : i32
    %19 = vector.broadcast %c15_i32 : i32 to vector<1x256xi32>
    %20 = arith.andi %18, %19 : vector<1x256xi32>
    %c0_i32_12 = arith.constant 0 : i32
    %21 = vector.broadcast %c0_i32_12 : i32 to vector<1x256xi32>
    %22 = arith.cmpi eq, %20, %21 : vector<1x256xi32>
    %c15_i32_13 = arith.constant 15 : i32
    %23 = vector.broadcast %c15_i32_13 : i32 to vector<1x256xi32>
    %24 = arith.cmpi eq, %20, %23 : vector<1x256xi32>
    %25 = vector.extract_strided_slice %15 {offsets = [0, 0], sizes = [4, 1], strides = [1, 1]} : vector<4x256xf32> to vector<4x1xf32>
    %26 = vector.extract_strided_slice %15 {offsets = [0, 0], sizes = [4, 255], strides = [1, 1]} : vector<4x256xf32> to vector<4x255xf32>
    %27 = tpu.concatenate %25, %26 in 1 : vector<4x1xf32>, vector<4x255xf32> -> vector<4x256xf32>
    %28 = vector.extract_strided_slice %15 {offsets = [0, 1], sizes = [4, 255], strides = [1, 1]} : vector<4x256xf32> to vector<4x255xf32>
    %29 = vector.extract_strided_slice %15 {offsets = [0, 255], sizes = [4, 1], strides = [1, 1]} : vector<4x256xf32> to vector<4x1xf32>
    %30 = tpu.concatenate %28, %29 in 1 : vector<4x255xf32>, vector<4x1xf32> -> vector<4x256xf32>
    %31 = vector.shape_cast %22 : vector<1x256xi1> to vector<1x256xi1>
    %32 = vector.broadcast %31 : vector<1x256xi1> to vector<4x256xi1>
    %33 = arith.select %32, %30, %27 : vector<4x256xi1>, vector<4x256xf32>
    %34 = vector.shape_cast %24 : vector<1x256xi1> to vector<1x256xi1>
    %35 = vector.broadcast %34 : vector<1x256xi1> to vector<4x256xi1>
    %36 = arith.select %35, %27, %30 : vector<4x256xi1>, vector<4x256xf32>
    %37 = vector.extract_strided_slice %3 {offsets = [0, 0], sizes = [4, 1], strides = [1, 1]} : vector<4x256xf32> to vector<4x1xf32>
    %38 = vector.extract_strided_slice %3 {offsets = [0, 0], sizes = [4, 255], strides = [1, 1]} : vector<4x256xf32> to vector<4x255xf32>
    %39 = tpu.concatenate %37, %38 in 1 : vector<4x1xf32>, vector<4x255xf32> -> vector<4x256xf32>
    %40 = vector.extract_strided_slice %3 {offsets = [0, 1], sizes = [4, 255], strides = [1, 1]} : vector<4x256xf32> to vector<4x255xf32>
    %41 = vector.extract_strided_slice %3 {offsets = [0, 255], sizes = [4, 1], strides = [1, 1]} : vector<4x256xf32> to vector<4x1xf32>
    %42 = tpu.concatenate %40, %41 in 1 : vector<4x255xf32>, vector<4x1xf32> -> vector<4x256xf32>
    %43 = vector.shape_cast %22 : vector<1x256xi1> to vector<1x256xi1>
    %44 = vector.broadcast %43 : vector<1x256xi1> to vector<4x256xi1>
    %45 = arith.select %44, %42, %39 : vector<4x256xi1>, vector<4x256xf32>
    %46 = vector.shape_cast %24 : vector<1x256xi1> to vector<1x256xi1>
    %47 = vector.broadcast %46 : vector<1x256xi1> to vector<4x256xi1>
    %48 = arith.select %47, %39, %42 : vector<4x256xi1>, vector<4x256xf32>
    %49 = vector.extract_strided_slice %17 {offsets = [0, 0], sizes = [4, 1], strides = [1, 1]} : vector<4x256xf32> to vector<4x1xf32>
    %50 = vector.extract_strided_slice %17 {offsets = [0, 0], sizes = [4, 255], strides = [1, 1]} : vector<4x256xf32> to vector<4x255xf32>
    %51 = tpu.concatenate %49, %50 in 1 : vector<4x1xf32>, vector<4x255xf32> -> vector<4x256xf32>
    %52 = vector.extract_strided_slice %17 {offsets = [0, 1], sizes = [4, 255], strides = [1, 1]} : vector<4x256xf32> to vector<4x255xf32>
    %53 = vector.extract_strided_slice %17 {offsets = [0, 255], sizes = [4, 1], strides = [1, 1]} : vector<4x256xf32> to vector<4x1xf32>
    %54 = tpu.concatenate %52, %53 in 1 : vector<4x255xf32>, vector<4x1xf32> -> vector<4x256xf32>
    %55 = vector.shape_cast %22 : vector<1x256xi1> to vector<1x256xi1>
    %56 = vector.broadcast %55 : vector<1x256xi1> to vector<4x256xi1>
    %57 = arith.select %56, %54, %51 : vector<4x256xi1>, vector<4x256xf32>
    %58 = vector.shape_cast %24 : vector<1x256xi1> to vector<1x256xi1>
    %59 = vector.broadcast %58 : vector<1x256xi1> to vector<4x256xi1>
    %60 = arith.select %59, %51, %54 : vector<4x256xi1>, vector<4x256xf32>
    %c0_14 = arith.constant 0 : index
    %c0_15 = arith.constant 0 : index
    %61 = vector.load %arg6[%c0_14, %c0_15] : memref<8x1xf32, #tpu.memory_space<vmem>>, vector<8x1xf32>
    %62 = tpu.concatenate %33, %15, %36, %45, %3, %48, %57, %17, %60 in 0 : vector<4x256xf32>, vector<4x256xf32>, vector<4x256xf32>, vector<4x256xf32>, vector<4x256xf32>, vector<4x256xf32>, vector<4x256xf32>, vector<4x256xf32>, vector<4x256xf32> -> vector<36x256xf32>
    %c0_16 = arith.constant 0 : index
    %c0_17 = arith.constant 0 : index
    %63 = vector.load %arg5[%c0_16, %c0_17] : memref<8x36xf32, #tpu.memory_space<vmem>>, vector<8x36xf32>
    %cst = arith.constant dense<0.000000e+00> : vector<8x256xf32>
    %64 = tpu.matmul %63, %62, %cst {dimension_numbers = #tpu.dot_dimension_numbers<[1], [0], [0], [1], [0, 0, 1, 1], [], []>} : vector<8x36xf32>, vector<36x256xf32>, vector<8x256xf32> -> vector<8x256xf32>
    %65 = vector.broadcast %61 : vector<8x1xf32> to vector<8x256xf32>
    %66 = arith.addf %64, %65 : vector<8x256xf32>
    %c0_18 = arith.constant 0 : index
    %c0_19 = arith.constant 0 : index
    %c0_20 = arith.constant 0 : index
    %67 = vector.load %arg7[%c0_18, %c0_19, %c0_20] : memref<1x8x256xf32, #tpu.memory_space<vmem>>, vector<1x8x256xf32>
    %68 = vector.shape_cast %67 : vector<1x8x256xf32> to vector<8x256xf32>
    %69 = vector.shape_cast %66 : vector<8x256xf32> to vector<1x8x256xf32>
    tpu.vector_store %arg7[%c0_18, %c0_19, %c0_20], %69 {strides = array<i32>} : memref<1x8x256xf32, #tpu.memory_space<vmem>>, vector<1x8x256xf32>,
    return
  }
  func.func @transform_0(%arg0: i32, %arg1: i32) -> (i32, i32, i32) {
    %c0_i32 = arith.constant 0 : i32
    %c0_i32_0 = arith.constant 0 : i32
    return %arg0, %c0_i32, %arg1 : i32, i32, i32
  }
  func.func @transform_1(%arg0: i32, %arg1: i32) -> (i32, i32, i32) {
    %c1_i32 = arith.constant 1 : i32
    %0 = arith.subi %arg1, %c1_i32 : i32
    %c0_i32 = arith.constant 0 : i32
    %1 = arith.maxsi %0, %c0_i32 : i32
    %c0_i32_0 = arith.constant 0 : i32
    %c0_i32_1 = arith.constant 0 : i32
    return %arg0, %c0_i32_0, %1 : i32, i32, i32
  }
  func.func @transform_2(%arg0: i32, %arg1: i32) -> (i32, i32, i32) {
    %c1_i32 = arith.constant 1 : i32
    %0 = arith.addi %arg1, %c1_i32 : i32
    %c0_i32 = arith.constant 0 : i32
    %1 = arith.minsi %0, %c0_i32 : i32
    %c0_i32_0 = arith.constant 0 : i32
    %c0_i32_1 = arith.constant 0 : i32
    return %arg0, %c0_i32_0, %1 : i32, i32, i32
  }
  func.func @transform_3(%arg0: i32, %arg1: i32) -> (i32, i32) {
    %c0_i32 = arith.constant 0 : i32
    %c0_i32_0 = arith.constant 0 : i32
    %c0_i32_1 = arith.constant 0 : i32
    return %c0_i32, %c0_i32_0 : i32, i32
  }
  func.func @transform_4(%arg0: i32, %arg1: i32) -> (i32, i32) {
    %c0_i32 = arith.constant 0 : i32
    %c0_i32_0 = arith.constant 0 : i32
    %c0_i32_1 = arith.constant 0 : i32
    return %c0_i32, %c0_i32_0 : i32, i32
  }
  func.func @transform_5(%arg0: i32, %arg1: i32) -> (i32, i32, i32) {
    %c0_i32 = arith.constant 0 : i32
    %c0_i32_0 = arith.constant 0 : i32
    return %arg0, %c0_i32, %arg1 : i32, i32, i32
  }
}

</mosaic_0001>

<llo_original>
// kernel: conv3x3_pallas.1
$region0: #{conv3x3_pallas.1}
  #allocation0 [shape = 'u32[]', space=smem, size = 0x4, offset = 0x4, fixed_abs, tag = 'smem constant byte address 0x4 - core index']
  #allocation1 [shape = 'u32[72,128]{1,0:T(1,128)}', space=vmem, size = 0x9000, scoped, tag = 'internal scratch']
  %s0 = inlined_call_operand.vmem [shape: f32[2,4,256], index: 0, kind: input, shape index: {}, may-alias: {0,1,2}]
  %s1 = inlined_call_operand.vmem [shape: f32[2,4,256], index: 1, kind: input, shape index: {}, may-alias: {0,1,2}]
  %s2 = inlined_call_operand.vmem [shape: f32[2,4,256], index: 2, kind: input, shape index: {}, may-alias: {0,1,2}]
  %s3 = inlined_call_operand.vmem [shape: f32[8,36], index: 3, kind: input, shape index: {}]
  %s4 = inlined_call_operand.vmem [shape: f32[8,1], index: 4, kind: input, shape index: {}]
  %s5 = inlined_call_operand.vmem [shape: f32[2,8,256], index: 5, kind: output, shape index: {}]
  %s6 = sld [smem:[#allocation0]]
  $region53: #{conv3x3_pallas.1} parent=0
    _
  %s8 = ssub.s32 1, %s6
  %s9 = scalar_select 0, %s8, %s6
  loop: start=0, step=1, limit=4
  $region2: #{conv3x3_pallas.1} parent=0 // loop_pre_header
    _
  $region3: #{conv3x3_pallas.1} parent=0 // loop_header
    %s11 = sphi 0, %s15
    %p12 = scmp.ge.s32.totalorder %s11, 4
    %s18 = sphi 0, %s30
    %s19 = sphi 0, %s26
    %s20 = sphi 0, %s18
    %s21 = sphi 0, %s19
    %s22 = sphi 0, %s20
    %s23 = sphi 0, %s21
    %s35 = sphi 0, %s37
    %s38 = sphi 0, %s35
    %s39 = sphi 0, %s38
    %s55 = sphi 0, %s39
    %s69 = sphi 0, %s71
    %s72 = sphi 0, %s69
    %s73 = sphi 0, %s72
    %s89 = sphi 0, %s73
    %s103 = sphi 0, %s105
    %s106 = sphi 0, %s103
    %s107 = sphi 0, %s106
    %s123 = sphi 0, %s107
    %s127 = sphi 0, %s127
    %s129 = sphi 0, %s127
    %s130 = sphi 0, %s129
    %s144 = sphi 0, %s130
    %s148 = sphi 0, %s148
    %s150 = sphi 0, %s148
    %s151 = sphi 0, %s150
    %s165 = sphi 0, %s151
    %s173 = sphi 0, %s175
    %s176 = sphi 0, %s173
    %s177 = sphi 0, %s176
    %s193 = sphi 0, %s177
  $region4: #{conv3x3_pallas.1} parent=0 // loop_header_branch
    %14 = sbr.rel (%p12) target = $region8
  $region5: #{conv3x3_pallas.1} parent=0 // loop_body
    %s16 = ssub.s32 %s11, 1
    %s17 = ssub.s32 %s11, 2
    %s24 = sadd.s32 1, %s19
    %p25 = scmp.ge.s32.totalorder %s24, 1
    %s26 = scalar_select %p25, 0, %s24
    %s27 = sadd.s32 1, %s18
    %s28 = scalar_select %p25, %s27, %s18
    %p29 = scmp.ge.s32.totalorder %s28, 2
    %s30 = scalar_select %p29, 0, %s28
    %s31 = ssub.s32 %s18, %s30
    %s32 = ssub.s32 %s19, %s26
    %s33 = sor.u32 %s31, %s32
    %p34 = scmp.eq.s32.totalorder %s33, 0
    %s36 = sadd.s32 %s35, 1
    %s37 = scalar_select %p34, %s35, %s36
    %p40 = pneg %p34
    %p41 = scmp.eq.s32.totalorder %s11, 1
    %p42 = por %p40, %p41
    %p43 = scmp.ne.s32.totalorder %s35, %s38
    %p44 = scmp.eq.s32.totalorder %s11, 0
    %p45 = por %p43, %p44
    %p46 = scmp.ne.s32.totalorder %s35, %s38
    %p47 = scmp.eq.s32.totalorder %s16, 1
    %p48 = por %p46, %p47
    %p49 = scmp.ne.s32.totalorder %s38, %s39
    %p50 = scmp.eq.s32.totalorder %s16, 0
    %p51 = por %p49, %p50
    %p52 = scmp.ne.s32.totalorder %s38, %s39
    %p53 = scmp.eq.s32.totalorder %s17, 1
    %p54 = por %p52, %p53
    %p56 = scmp.ne.s32.totalorder %s39, %s55
    %p57 = scmp.eq.s32.totalorder %s17, 0
    %p58 = por %p56, %p57
    %s59 = ssub.s32 %s19, 1
    %p60 = scmp.gt.s32.totalorder %s59, 0
    %s61 = scalar_select %p60, %s59, 0
    %s62 = ssub.s32 %s26, 1
    %p63 = scmp.gt.s32.totalorder %s62, 0
    %s64 = scalar_select %p63, %s62, 0
    %s65 = ssub.s32 %s18, %s30
    %s66 = ssub.s32 %s61, %s64
    %s67 = sor.u32 %s65, %s66
    %p68 = scmp.eq.s32.totalorder %s67, 0
    %s70 = sadd.s32 %s69, 1
    %s71 = scalar_select %p68, %s69, %s70
    %p74 = pneg %p68
    %p75 = scmp.eq.s32.totalorder %s11, 1
    %p76 = por %p74, %p75
    %p77 = scmp.ne.s32.totalorder %s69, %s72
    %p78 = scmp.eq.s32.totalorder %s11, 0
    %p79 = por %p77, %p78
    %p80 = scmp.ne.s32.totalorder %s69, %s72
    %p81 = scmp.eq.s32.totalorder %s16, 1
    %p82 = por %p80, %p81
    %p83 = scmp.ne.s32.totalorder %s72, %s73
    %p84 = scmp.eq.s32.totalorder %s16, 0
    %p85 = por %p83, %p84
    %p86 = scmp.ne.s32.totalorder %s72, %s73
    %p87 = scmp.eq.s32.totalorder %s17, 1
    %p88 = por %p86, %p87
    %p90 = scmp.ne.s32.totalorder %s73, %s89
    %p91 = scmp.eq.s32.totalorder %s17, 0
    %p92 = por %p90, %p91
    %s93 = sadd.s32 %s19, 1
    %p94 = scmp.lt.s32.totalorder %s93, 0
    %s95 = scalar_select %p94, %s93, 0
    %s96 = sadd.s32 %s26, 1
    %p97 = scmp.lt.s32.totalorder %s96, 0
    %s98 = scalar_select %p97, %s96, 0
    %s99 = ssub.s32 %s18, %s30
    %s100 = ssub.s32 %s95, %s98
    %s101 = sor.u32 %s99, %s100
    %p102 = scmp.eq.s32.totalorder %s101, 0
    %s104 = sadd.s32 %s103, 1
    %s105 = scalar_select %p102, %s103, %s104
    %p108 = pneg %p102
    %p109 = scmp.eq.s32.totalorder %s11, 1
    %p110 = por %p108, %p109
    %p111 = scmp.ne.s32.totalorder %s103, %s106
    %p112 = scmp.eq.s32.totalorder %s11, 0
    %p113 = por %p111, %p112
    %p114 = scmp.ne.s32.totalorder %s103, %s106
    %p115 = scmp.eq.s32.totalorder %s16, 1
    %p116 = por %p114, %p115
    %p117 = scmp.ne.s32.totalorder %s106, %s107
    %p118 = scmp.eq.s32.totalorder %s16, 0
    %p119 = por %p117, %p118
    %p120 = scmp.ne.s32.totalorder %s106, %s107
    %p121 = scmp.eq.s32.totalorder %s17, 1
    %p122 = por %p120, %p121
    %p124 = scmp.ne.s32.totalorder %s107, %s123
    %p125 = scmp.eq.s32.totalorder %s17, 0
    %p126 = por %p124, %p125
    %s128 = sadd.s32 %s127, 1
    %p131 = scmp.eq.s32.totalorder %s11, 1
    %p132 = scmp.ne.s32.totalorder %s127, %s129
    %p133 = scmp.eq.s32.totalorder %s11, 0
    %p134 = por %p132, %p133
    %p135 = scmp.ne.s32.totalorder %s127, %s129
    %p136 = scmp.eq.s32.totalorder %s16, 1
    %p137 = por %p135, %p136
    %p138 = scmp.ne.s32.totalorder %s129, %s130
    %p139 = scmp.eq.s32.totalorder %s16, 0
    %p140 = por %p138, %p139
    %p141 = scmp.ne.s32.totalorder %s129, %s130
    %p142 = scmp.eq.s32.totalorder %s17, 1
    %p143 = por %p141, %p142
    %p145 = scmp.ne.s32.totalorder %s130, %s144
    %p146 = scmp.eq.s32.totalorder %s17, 0
    %p147 = por %p145, %p146
    %s149 = sadd.s32 %s148, 1
    %p152 = scmp.eq.s32.totalorder %s11, 1
    %p153 = scmp.ne.s32.totalorder %s148, %s150
    %p154 = scmp.eq.s32.totalorder %s11, 0
    %p155 = por %p153, %p154
    %p156 = scmp.ne.s32.totalorder %s148, %s150
    %p157 = scmp.eq.s32.totalorder %s16, 1
    %p158 = por %p156, %p157
    %p159 = scmp.ne.s32.totalorder %s150, %s151
    %p160 = scmp.eq.s32.totalorder %s16, 0
    %p161 = por %p159, %p160
    %p162 = scmp.ne.s32.totalorder %s150, %s151
    %p163 = scmp.eq.s32.totalorder %s17, 1
    %p164 = por %p162, %p163
    %p166 = scmp.ne.s32.totalorder %s151, %s165
    %p167 = scmp.eq.s32.totalorder %s17, 0
    %p168 = por %p166, %p167
    %s169 = ssub.s32 %s18, %s30
    %s170 = ssub.s32 %s19, %s26
    %s171 = sor.u32 %s169, %s170
    %p172 = scmp.eq.s32.totalorder %s171, 0
    %s174 = sadd.s32 %s173, 1
    %s175 = scalar_select %p172, %s173, %s174
    %p178 = pneg %p172
    %p179 = scmp.eq.s32.totalorder %s11, 1
    %p180 = por %p178, %p179
    %p181 = scmp.ne.s32.totalorder %s173, %s176
    %p182 = scmp.eq.s32.totalorder %s11, 0
    %p183 = por %p181, %p182
    %p184 = scmp.ne.s32.totalorder %s173, %s176
    %p185 = scmp.eq.s32.totalorder %s16, 1
    %p186 = por %p184, %p185
    %p187 = scmp.ne.s32.totalorder %s176, %s177
    %p188 = scmp.eq.s32.totalorder %s16, 0
    %p189 = por %p187, %p188
    %p190 = scmp.ne.s32.totalorder %s176, %s177
    %p191 = scmp.eq.s32.totalorder %s17, 1
    %p192 = por %p190, %p191
    %p194 = scmp.ne.s32.totalorder %s177, %s193
    %p195 = scmp.eq.s32.totalorder %s17, 0
    %p196 = por %p194, %p195
    %p197 = scmp.le.s32.totalorder 1, %s11
    %p198 = scmp.lt.s32.totalorder %s11, 3
    %p199 = pnand %p197, %p198
    %p200 = pneg %p199
    // Predicated region
    $region9: #{conv3x3_pallas.1} parent=5 // pred_check
      _
    $region10: #{conv3x3_pallas.1} parent=5 // pred_check_branch
      %202 = sbr.rel (%p199) target = $region12
    $region11: #{conv3x3_pallas.1} parent=5 // pred_region
      %s203 = ssub.s32 %s11, 1
      // Predicated region
      $region13: #{conv3x3_pallas.1} parent=11 // pred_check
        %p204 = pneg %p140
      $region14: #{conv3x3_pallas.1} parent=11 // pred_check_branch
        %206 = sbr.rel (%p204) target = $region16
      $region15: #{conv3x3_pallas.1} parent=11 // pred_region
        _
      $region16: #{conv3x3_pallas.1} parent=11 // pred_fallthru
        _
      // Predicated region
      $region17: #{conv3x3_pallas.1} parent=11 // pred_check
        %p207 = pneg %p161
      $region18: #{conv3x3_pallas.1} parent=11 // pred_check_branch
        %209 = sbr.rel (%p207) target = $region20
      $region19: #{conv3x3_pallas.1} parent=11 // pred_region
        _
      $region20: #{conv3x3_pallas.1} parent=11 // pred_fallthru
        _
    $region12: #{conv3x3_pallas.1} parent=5 // pred_fallthru
      _
    %p210 = scmp.lt.s32.totalorder %s11, 2
    // Predicated region
    $region21: #{conv3x3_pallas.1} parent=5 // pred_check
      %p211 = pneg %p210
    $region22: #{conv3x3_pallas.1} parent=5 // pred_check_branch
      %213 = sbr.rel (%p211) target = $region24
    $region23: #{conv3x3_pallas.1} parent=5 // pred_region
      // Predicated region
      $region25: #{conv3x3_pallas.1} parent=23 // pred_check
        %p214 = pneg %p45
      $region26: #{conv3x3_pallas.1} parent=23 // pred_check_branch
        %216 = sbr.rel (%p214) target = $region28
      $region27: #{conv3x3_pallas.1} parent=23 // pred_region
        %s217 = smul.u32 2, %s19
        %p218 = scmp.lt.s32.totalorder %s18, 1
        %s219 = scalar_select %p218, %s18, 1
        %p220 = scmp.lt.s32.totalorder %s217, 1
        %s221 = scalar_select %p220, %s217, 1
        %s222 = smul.addr %s219, 2
        %s223 = sadd.s32 %s221, %s222
        %s224 = smul.addr %s223, 4
        %s225 = scalar_lea.vmem %s0, %s224
        %s226 = smul.u32 2, %s19
      $region28: #{conv3x3_pallas.1} parent=23 // pred_fallthru
        _
      // Predicated region
      $region29: #{conv3x3_pallas.1} parent=23 // pred_check
        %p227 = pneg %p79
      $region30: #{conv3x3_pallas.1} parent=23 // pred_check_branch
        %229 = sbr.rel (%p227) target = $region32
      $region31: #{conv3x3_pallas.1} parent=23 // pred_region
        %s230 = ssub.s32 %s19, 1
        %p231 = scmp.gt.s32.totalorder %s230, 0
        %s232 = scalar_select %p231, %s230, 0
        %s233 = smul.u32 2, %s232
        %p234 = scmp.lt.s32.totalorder %s18, 1
        %s235 = scalar_select %p234, %s18, 1
        %p236 = scmp.lt.s32.totalorder %s233, 1
        %s237 = scalar_select %p236, %s233, 1
        %s238 = smul.addr %s235, 2
        %s239 = sadd.s32 %s237, %s238
        %s240 = smul.addr %s239, 4
        %s241 = scalar_lea.vmem %s1, %s240
        %s242 = ssub.s32 %s19, 1
        %p243 = scmp.gt.s32.totalorder %s242, 0
        %s244 = scalar_select %p243, %s242, 0
        %s245 = smul.u32 2, %s244
      $region32: #{conv3x3_pallas.1} parent=23 // pred_fallthru
        _
      // Predicated region
      $region33: #{conv3x3_pallas.1} parent=23 // pred_check
        %p246 = pneg %p113
      $region34: #{conv3x3_pallas.1} parent=23 // pred_check_branch
        %248 = sbr.rel (%p246) target = $region36
      $region35: #{conv3x3_pallas.1} parent=23 // pred_region
        %s249 = sadd.s32 %s19, 1
        %p250 = scmp.lt.s32.totalorder %s249, 0
        %s251 = scalar_select %p250, %s249, 0
        %s252 = smul.u32 2, %s251
        %p253 = scmp.lt.s32.totalorder %s18, 1
        %s254 = scalar_select %p253, %s18, 1
        %p255 = scmp.lt.s32.totalorder %s252, 1
        %s256 = scalar_select %p255, %s252, 1
        %s257 = smul.addr %s254, 2
        %s258 = sadd.s32 %s256, %s257
        %s259 = smul.addr %s258, 4
        %s260 = scalar_lea.vmem %s2, %s259
        %s261 = sadd.s32 %s19, 1
        %p262 = scmp.lt.s32.totalorder %s261, 0
        %s263 = scalar_select %p262, %s261, 0
        %s264 = smul.u32 2, %s263
      $region36: #{conv3x3_pallas.1} parent=23 // pred_fallthru
        _
    $region24: #{conv3x3_pallas.1} parent=5 // pred_fallthru
      _
    %p265 = scmp.le.s32.totalorder 1, %s11
    %p266 = scmp.lt.s32.totalorder %s11, 3
    %p267 = pnand %p265, %p266
    %p268 = pneg %p267
    // Predicated region
    $region37: #{conv3x3_pallas.1} parent=5 // pred_check
      _
    $region38: #{conv3x3_pallas.1} parent=5 // pred_check_branch
      %270 = sbr.rel (%p267) target = $region40
    $region39: #{conv3x3_pallas.1} parent=5 // pred_region
      %s271 = ssub.s32 %s11, 1
      %s272 = smul.u32 2, %s21
      %p273 = scmp.lt.s32.totalorder %s20, 1
      %s274 = scalar_select %p273, %s20, 1
      %p275 = scmp.lt.s32.totalorder %s272, 1
      %s276 = scalar_select %p275, %s272, 1
      %s277 = smul.addr %s274, 2
      %s278 = sadd.s32 %s276, %s277
      %s279 = smul.addr %s278, 4
      %s280 = scalar_lea.vmem %s0, %s279
      %p281 = pneg %p51
      %p282 = pneg %p48
      %s283 = ssub.s32 %s21, 1
      %p284 = scmp.gt.s32.totalorder %s283, 0
      %s285 = scalar_select %p284, %s283, 0
      %s286 = smul.u32 2, %s285
      %p287 = scmp.lt.s32.totalorder %s20, 1
      %s288 = scalar_select %p287, %s20, 1
      %p289 = scmp.lt.s32.totalorder %s286, 1
      %s290 = scalar_select %p289, %s286, 1
      %s291 = smul.addr %s288, 2
      %s292 = sadd.s32 %s290, %s291
      %s293 = smul.addr %s292, 4
      %s294 = scalar_lea.vmem %s1, %s293
      %p295 = pneg %p85
      %p296 = pneg %p82
      %s297 = sadd.s32 %s21, 1
      %p298 = scmp.lt.s32.totalorder %s297, 0
      %s299 = scalar_select %p298, %s297, 0
      %s300 = smul.u32 2, %s299
      %p301 = scmp.lt.s32.totalorder %s20, 1
      %s302 = scalar_select %p301, %s20, 1
      %p303 = scmp.lt.s32.totalorder %s300, 1
      %s304 = scalar_select %p303, %s300, 1
      %s305 = smul.addr %s302, 2
      %s306 = sadd.s32 %s304, %s305
      %s307 = smul.addr %s306, 4
      %s308 = scalar_lea.vmem %s2, %s307
      %p309 = pneg %p119
      %p310 = pneg %p116
      %p311 = pneg %p140
      %p312 = pneg %p137
      %p313 = pneg %p161
      %p314 = pneg %p158
      %p315 = pneg %p189
      %p316 = pneg %p186
      %s317 = smul.u32 2, %s21
      %p318 = scmp.lt.s32.totalorder %s20, 1
      %s319 = scalar_select %p318, %s20, 1
      %p320 = scmp.lt.s32.totalorder %s317, 1
      %s321 = scalar_select %p320, %s317, 1
      %s322 = smul.addr %s319, 2
      %s323 = sadd.s32 %s321, %s322
      %s324 = smul.addr %s323, 8
      %s325 = scalar_lea.vmem %s5, %s324
      %s326 = smul.u32 2, %s21
      %p327 = scmp.lt.s32.totalorder %s20, 1
      %s328 = scalar_select %p327, %s20, 1
      %p329 = scmp.lt.s32.totalorder %s326, 1
      %s330 = scalar_select %p329, %s326, 1
      %s331 = smul.addr %s328, 2
      %s332 = sadd.s32 %s330, %s331
      %s333 = smul.addr %s332, 4
      %s334 = scalar_lea.vmem %s0, %s333
      %s335 = smul.u32 2, %s21
      %s336 = ssub.s32 %s21, 1
      %p337 = scmp.gt.s32.totalorder %s336, 0
      %s338 = scalar_select %p337, %s336, 0
      %s339 = smul.u32 2, %s338
      %p340 = scmp.lt.s32.totalorder %s20, 1
      %s341 = scalar_select %p340, %s20, 1
      %p342 = scmp.lt.s32.totalorder %s339, 1
      %s343 = scalar_select %p342, %s339, 1
      %s344 = smul.addr %s341, 2
      %s345 = sadd.s32 %s343, %s344
      %s346 = smul.addr %s345, 4
      %s347 = scalar_lea.vmem %s1, %s346
      %s348 = ssub.s32 %s21, 1
      %p349 = scmp.gt.s32.totalorder %s348, 0
      %s350 = scalar_select %p349, %s348, 0
      %s351 = smul.u32 2, %s350
      %s352 = sadd.s32 %s21, 1
      %p353 = scmp.lt.s32.totalorder %s352, 0
      %s354 = scalar_select %p353, %s352, 0
      %s355 = smul.u32 2, %s354
      %p356 = scmp.lt.s32.totalorder %s20, 1
      %s357 = scalar_select %p356, %s20, 1
      %p358 = scmp.lt.s32.totalorder %s355, 1
      %s359 = scalar_select %p358, %s355, 1
      %s360 = smul.addr %s357, 2
      %s361 = sadd.s32 %s359, %s360
      %s362 = smul.addr %s361, 4
      %s363 = scalar_lea.vmem %s2, %s362
      %s364 = sadd.s32 %s21, 1
      %p365 = scmp.lt.s32.totalorder %s364, 0
      %s366 = scalar_select %p365, %s364, 0
      %s367 = smul.u32 2, %s366
      %s368 = smul.u32 2, %s21
      %p369 = scmp.lt.s32.totalorder %s20, 1
      %s370 = scalar_select %p369, %s20, 1
      %p371 = scmp.lt.s32.totalorder %s368, 1
      %s372 = scalar_select %p371, %s368, 1
      %s373 = smul.addr %s370, 2
      %s374 = sadd.s32 %s372, %s373
      %s375 = smul.addr %s374, 8
      %s376 = scalar_lea.vmem %s5, %s375
      %s377 = smul.u32 2, %s21
      %p378 = scmp.eq.s32.totalorder %s21, 0
      %v379 = vld [vmem:[%s334] sm:$0xff]
      %v380 = vld [vmem:[%s347] sm:$0xf]
      %v381 = vld [vmem:[%s347 + $0x4] sm:$0xf]
      %s382 = scalar_select %p378, 1, 0
      %v383 = vstv %s382
      %vm384 = vcmp.eq.s32.totalorder %v383, 1
      %386 = vrot.lane.b32.xlu0 %v381, 32
      %v387 = vpop.permute.xlu0 %386
      %v389 = vsel %vm384, %v380, %v387
      %v390 = vld [vmem:[%s363 + $0x4] sm:$0xf]
      %v391 = vld [vmem:[%s363] sm:$0xf]
      %393 = vrot.lane.b32.xlu0 %v391, 96
      %v394 = vpop.permute.xlu0 %393
      %v396 = vsel %vm384, %v390, %v394
      %398 = vst [vmem:[#allocation1] ss:$2 sm:$0xff] %v389
      %v399 = vld.sshfl [vmem:[#allocation1] sm:$0xff pattern:$0x75316420]
      %400 = vrot.lane.b32.xlu0 %v399, 112
      %v401 = vpop.permute.xlu0 %400
      %404 = vst [vmem:[#allocation1] ss:$2 sm:$0xff] %v379
      %v405 = vld.sshfl [vmem:[#allocation1] sm:$0xff pattern:$0x75316420]
      %v406 = vld.sshfl [vmem:[#allocation1 + $0x8] sm:$0xff pattern:$0x75316420]
      %407 = vrot.lane.b32.xlu0 %v405, 16
      %v408 = vpop.permute.xlu0 %407
      %409 = vrot.lane.b32.xlu0 %v406, 16
      %v410 = vpop.permute.xlu0 %409
      %vm411 = vcmask 130048
      %v412 = vsel %vm411, %v408, %v410
      %v415 = vsel %vm411, %v401, %v408
      %416 = vst [vmem:[#allocation1] ss:$2 sm:$0xff] %v379
      %v417 = vld.sshfl [vmem:[#allocation1] sm:$0xff pattern:$0x75316420]
      %v418 = vld.sshfl [vmem:[#allocation1 + $0x8] sm:$0xff pattern:$0x75316420]
      %419 = vrot.lane.b32.xlu0 %v417, 112
      %v420 = vpop.permute.xlu0 %419
      %421 = vrot.lane.b32.xlu0 %v418, 112
      %v422 = vpop.permute.xlu0 %421
      %vm423 = vcmask 916480
      %v424 = vsel %vm423, %v420, %v422
      %428 = vst [vmem:[#allocation1] ss:$2 sm:$0xff] %v396
      %v429 = vld.sshfl [vmem:[#allocation1] sm:$0xff pattern:$0x75316420]
      %430 = vrot.lane.b32.xlu0 %v429, 16
      %v431 = vpop.permute.xlu0 %430
      %v433 = vsel %vm423, %v422, %v431
      %v434 = vlaneseq
      %v435 = vand.u32 %v434, 127
      %v436 = vadd.s32 %v435, 128
      %v437 = vand.u32 %v435, 15
      %v438 = vand.u32 %v436, 15
      %vm439 = vcmp.eq.s32.totalorder %v437, 0
      %vm440 = vcmp.eq.s32.totalorder %v438, 0
      %vm441 = vcmp.eq.s32.totalorder %v437, 15
      %vm442 = vcmp.eq.s32.totalorder %v438, 15
      %444 = vrot.lane.b32.xlu0 %v415, 1
      %v445 = vpop.permute.xlu0 %444
      %446 = vrot.lane.b32.xlu0 %v412, 1
      %v447 = vpop.permute.xlu0 %446
      %vm448 = vcmask 7168
      %v449 = vsel %vm448, %v445, %v447
      %v452 = vsel %vm448, %v415, %v445
      %453 = vrot.lane.b32.xlu0 %v415, 127
      %v454 = vpop.permute.xlu0 %453
      %455 = vrot.lane.b32.xlu0 %v412, 127
      %v456 = vpop.permute.xlu0 %455
      %vm457 = vcmask 1039360
      %v458 = vsel %vm457, %v454, %v456
      %v461 = vsel %vm457, %v456, %v412
      %v462 = vsel %vm439, 1, 0
      %v463 = vsel %vm440, 1, 0
      %vm464 = vcmp.eq.s32.totalorder %v462, 1
      %vm465 = vcmp.eq.s32.totalorder %v463, 1
      %v466 = vsel %vm464, %v458, %v452
      %v467 = vsel %vm465, %v461, %v449
      %v468 = vsel %vm441, 1, 0
      %v469 = vsel %vm442, 1, 0
      %vm470 = vcmp.eq.s32.totalorder %v468, 1
      %vm471 = vcmp.eq.s32.totalorder %v469, 1
      %v472 = vsel %vm470, %v452, %v458
      %v473 = vsel %vm471, %v449, %v461
      %474 = vst [vmem:[#allocation1] ss:$2 sm:$0xff] %v379
      %v475 = vld.sshfl [vmem:[#allocation1] sm:$0xff pattern:$0x75316420]
      %v476 = vld.sshfl [vmem:[#allocation1 + $0x8] sm:$0xff pattern:$0x75316420]
      %477 = vrot.lane.b32.xlu0 %v475, 1
      %v478 = vpop.permute.xlu0 %477
      %479 = vrot.lane.b32.xlu0 %v476, 1
      %v480 = vpop.permute.xlu0 %479
      %v481 = vsel %vm448, %v478, %v480
      %v484 = vsel %vm448, %v379, %v478
      %485 = vst [vmem:[#allocation1] ss:$2 sm:$0xff] %v379
      %v486 = vld.sshfl [vmem:[#allocation1] sm:$0xff pattern:$0x75316420]
      %v487 = vld.sshfl [vmem:[#allocation1 + $0x8] sm:$0xff pattern:$0x75316420]
      %488 = vrot.lane.b32.xlu0 %v486, 127
      %v489 = vpop.permute.xlu0 %488
      %490 = vrot.lane.b32.xlu0 %v487, 127
      %v491 = vpop.permute.xlu0 %490
      %v492 = vsel %vm457, %v489, %v491
      %495 = vst [vmem:[#allocation1] ss:$2 sm:$0xff] %v379
      %v496 = vld.sshfl [vmem:[#allocation1 + $0x8] sm:$0xff pattern:$0x75316420]
      %v498 = vsel %vm457, %v491, %v496
      %v499 = vsel %vm464, %v492, %v484
      %v500 = vsel %vm465, %v498, %v481
      %v501 = vsel %vm470, %v484, %v492
      %v502 = vsel %vm471, %v481, %v498
      %504 = vrot.lane.b32.xlu0 %v424, 1
      %v505 = vpop.permute.xlu0 %504
      %506 = vrot.lane.b32.xlu0 %v433, 1
      %v507 = vpop.permute.xlu0 %506
      %v508 = vsel %vm448, %v505, %v507
      %v511 = vsel %vm448, %v424, %v505
      %512 = vrot.lane.b32.xlu0 %v424, 127
      %v513 = vpop.permute.xlu0 %512
      %514 = vrot.lane.b32.xlu0 %v433, 127
      %v515 = vpop.permute.xlu0 %514
      %v516 = vsel %vm457, %v513, %v515
      %v519 = vsel %vm457, %v515, %v433
      %v520 = vsel %vm464, %v516, %v511
      %v521 = vsel %vm465, %v519, %v508
      %v522 = vsel %vm470, %v511, %v516
      %v523 = vsel %vm471, %v508, %v519
      %v524 = vld [vmem:[%s4] sm:$0xff]
      %v525 = vrot.slane %v415, 4
      %v526 = vrot.slane %v412, 4
      %v531 = vrot.slane %v499, 4
      %v532 = vrot.slane %v500, 4
      %535 = vst [vmem:[#allocation1] ss:$2 sm:$0xff] %v379
      %v536 = vld.sshfl [vmem:[#allocation1] sm:$0xff pattern:$0x75316420]
      %v537 = vld.sshfl [vmem:[#allocation1 + $0x8] sm:$0xff pattern:$0x75316420]
      %v542 = vrot.slane %v501, 4
      %v543 = vrot.slane %v502, 4
      %v546 = vrot.slane %v424, 4
      %v547 = vrot.slane %v433, 4
      %vm550 = vcmask 1043456
      %v551 = vsel %vm550, %v466, %v525
      %v552 = vsel %vm550, %v467, %v526
      %v553 = vsel %vm550, %v472, %v531
      %v554 = vsel %vm550, %v473, %v532
      %v555 = vsel %vm550, %v536, %v542
      %v556 = vsel %vm550, %v537, %v543
      %v557 = vsel %vm550, %v520, %v546
      %v558 = vsel %vm550, %v521, %v547
      %v559 = vld [vmem:[%s3] sm:$0xff]
      %561 = vset.pattern.permute.xlu0 0
      %562 = vperm.xlu0 %561, %v524
      %v563 = vpop.permute.xlu0 %562
      %vm565 = vcmask 293888
      %v567 = vsel %vm565, %v559, 0
      %v570 = vsel %vm550, %v522, 0
      %v573 = vsel %vm550, %v523, 0
      %575 = vmatpush.msra.mxu0 0.0
      %576 = vmatpush.msra.mxu0 0.0
      %577 = vmatpush.msra.mxu0 0.0
      %578 = vmatpush.msra.mxu0 0.0
      %579 = vmatpush.msra.mxu0 0.0
      %580 = vmatpush.msra.mxu0 0.0
      %581 = vmatpush.msra.mxu0 0.0
      %582 = vmatpush.msra.mxu0 0.0
      %583 = vmatpush.msra.mxu0 0.0
      %584 = vmatpush.msra.mxu0 0.0
      %585 = vmatpush.msra.mxu0 0.0
      %586 = vmatpush.msra.mxu0 %v570
      %587 = vmatpush.msra.mxu0 %v557
      %588 = vmatpush.msra.mxu0 %v555
      %589 = vmatpush.msra.mxu0 %v553
      %590 = vmatpush.msra.mxu0 %v551
      %591 = vmatmul.f32.gmra.mxu0 %v567
      %v592 = vpop.f32.mrf.mxu0
      %v593 = vadd.f32 %v563, %v592
      %594 = vdwg.mxu0
      %595 = vmatpush.msra.mxu0 0.0
      %596 = vmatpush.msra.mxu0 0.0
      %597 = vmatpush.msra.mxu0 0.0
      %598 = vmatpush.msra.mxu0 0.0
      %599 = vmatpush.msra.mxu0 0.0
      %600 = vmatpush.msra.mxu0 0.0
      %601 = vmatpush.msra.mxu0 0.0
      %602 = vmatpush.msra.mxu0 0.0
      %603 = vmatpush.msra.mxu0 0.0
      %604 = vmatpush.msra.mxu0 0.0
      %605 = vmatpush.msra.mxu0 0.0
      %606 = vmatpush.msra.mxu0 %v573
      %607 = vmatpush.msra.mxu0 %v558
      %608 = vmatpush.msra.mxu0 %v556
      %609 = vmatpush.msra.mxu0 %v554
      %610 = vmatpush.msra.mxu0 %v552
      %611 = vmatmul.f32.gmra.mxu0 %v567
      %v612 = vpop.f32.mrf.mxu0
      %v613 = vadd.f32 %v563, %v612
      %614 = vdwg.mxu0
      %615 = vst [vmem:[%s376] sm:$0xff] %v593
      %616 = vst [vmem:[%s376 + $0x8] sm:$0xff] %v613
      %s617 = smul.u32 2, %s21
      %p618 = scmp.lt.s32.totalorder %s20, 1
      %s619 = scalar_select %p618, %s20, 1
      %p620 = scmp.lt.s32.totalorder %s617, 1
      %s621 = scalar_select %p620, %s617, 1
      %s622 = smul.addr %s619, 2
      %s623 = sadd.s32 %s621, %s622
      %s624 = smul.addr %s623, 8
      %s625 = scalar_lea.vmem %s5, %s624
      // Predicated region
      $region41: #{conv3x3_pallas.1} parent=39 // pred_check
        %p626 = pneg %p186
      $region42: #{conv3x3_pallas.1} parent=39 // pred_check_branch
        %628 = sbr.rel (%p626) target = $region44
      $region43: #{conv3x3_pallas.1} parent=39 // pred_region
        %s629 = smul.u32 2, %s21
      $region44: #{conv3x3_pallas.1} parent=39 // pred_fallthru
        _
    $region40: #{conv3x3_pallas.1} parent=5 // pred_fallthru
      _
    %p630 = scmp.le.s32.totalorder 2, %s11
    // Predicated region
    $region45: #{conv3x3_pallas.1} parent=5 // pred_check
      %p631 = pneg %p630
    $region46: #{conv3x3_pallas.1} parent=5 // pred_check_branch
      %633 = sbr.rel (%p631) target = $region48
    $region47: #{conv3x3_pallas.1} parent=5 // pred_region
      %s634 = ssub.s32 %s11, 2
      // Predicated region
      $region49: #{conv3x3_pallas.1} parent=47 // pred_check
        %p635 = pneg %p192
      $region50: #{conv3x3_pallas.1} parent=47 // pred_check_branch
        %637 = sbr.rel (%p635) target = $region52
      $region51: #{conv3x3_pallas.1} parent=47 // pred_region
        %s638 = smul.u32 2, %s23
        %p639 = scmp.lt.s32.totalorder %s22, 1
        %s640 = scalar_select %p639, %s22, 1
        %p641 = scmp.lt.s32.totalorder %s638, 1
        %s642 = scalar_select %p641, %s638, 1
        %s643 = smul.addr %s640, 2
        %s644 = sadd.s32 %s642, %s643
        %s645 = smul.addr %s644, 8
        %s646 = scalar_lea.vmem %s5, %s645
      $region52: #{conv3x3_pallas.1} parent=47 // pred_fallthru
        _
    $region48: #{conv3x3_pallas.1} parent=5 // pred_fallthru
      _
  $region6: #{conv3x3_pallas.1} parent=0 // loop_footer
    %s15 = sadd.s32 1, %s11
  $region7: #{conv3x3_pallas.1} parent=0 // loop_footer_branch
    %10 = sbr.rel target = $region3
  $region8: #{conv3x3_pallas.1} parent=0 // loop_exit
    _

</llo_original>
